<compile_context>
chip_gen: v7x
topology: tpu7x:2x2x1
jax: 0.10.0
libtpu: 0.0.40
codegen_flags: <defaults>
</compile_context>

<pallas_src>
import jax
import jax.numpy as jnp
from jax.experimental import pallas as pl
from jax.experimental.pallas import tpu as pltpu


def _affine_rows_kernel(x_ref, s_ref, b_ref, y_ref):
    """y = s * x + b over a lane-dense (rows, H*W) tile; s, b are (rows, 1)."""
    y = x_ref[...].astype(jnp.float32) * s_ref[...] + b_ref[...]
    y_ref[...] = y.astype(y_ref.dtype)


def _choose_rows_per_tile(n_rows, row_bytes):
    """Sublane-aligned row tile of ~2 MiB; keep >=8 grid steps when possible."""
    target_bytes = 2 << 20  # ~2 MiB/tile: 2x(in)+2x(out) buffers fit v5e's 16 MiB scoped VMEM
    rows = max(1, target_bytes // max(1, row_bytes))
    rows = max(8, (rows // 8) * 8)
    if rows >= n_rows:
        return n_rows  # full extent is always a legal block size
    # Keep at least ~8 grid steps (megacore on v7x, deeper pipeline) when big enough.
    rows_for_8_steps = ((n_rows // 8) // 8) * 8
    if rows_for_8_steps >= 8:
        rows = min(rows, rows_for_8_steps)
    return rows


def _per_channel_affine(x, scale_c, offset_c):
    """Applies y[:, c] = scale_c[c] * x[:, c] + offset_c[c] via one Pallas call."""
    B, C, H, W = x.shape
    R, HW = B * C, H * W

    # Zero-copy lane-dense 2D view: rows = (batch, channel), cols = H*W plane.
    x2d = x.reshape(R, HW)
    s_rows = jnp.broadcast_to(scale_c[None, :], (B, C)).reshape(R, 1)
    b_rows = jnp.broadcast_to(offset_c[None, :], (B, C)).reshape(R, 1)

    rows_per_tile = _choose_rows_per_tile(R, HW * x.dtype.itemsize)
    grid = (pl.cdiv(R, rows_per_tile),)

    y2d = pl.pallas_call(
        _affine_rows_kernel,
        out_shape=jax.ShapeDtypeStruct((R, HW), x.dtype),
        grid=grid,
        in_specs=[
            pl.BlockSpec((rows_per_tile, HW), lambda i: (i, 0)),
            pl.BlockSpec((rows_per_tile, 1), lambda i: (i, 0)),
            pl.BlockSpec((rows_per_tile, 1), lambda i: (i, 0)),
        ],
        out_specs=pl.BlockSpec((rows_per_tile, HW), lambda i: (i, 0)),
        compiler_params=pltpu.CompilerParams(
            dimension_semantics=("parallel",),
        ),
    )(x2d, s_rows, b_rows)

    return y2d.reshape(B, C, H, W)


def actnorm_forward(x, s, b):
    """y = s * x + b, jac = H*W * sum(log|s|)."""
    B, C, H, W = x.shape
    s_flat = s.reshape(C).astype(jnp.float32)
    b_flat = b.reshape(C).astype(jnp.float32)
    y = _per_channel_affine(x, s_flat, b_flat)
    # O(C) reduction: plain JAX, no dedicated kernel launch.
    jac = jnp.float32(H * W) * jnp.sum(jnp.log(jnp.abs(s_flat)))
    return y, jac


def actnorm_inverse(y, s, b):
    """InverseWrapper.forward: x = (y - b) / s, jac = -H*W * sum(log|s|)."""
    B, C, H, W = y.shape
    s_flat = s.reshape(C).astype(jnp.float32)
    b_flat = b.reshape(C).astype(jnp.float32)
    inv_s = 1.0 / s_flat
    x = _per_channel_affine(y, inv_s, -b_flat * inv_s)
    jac = -jnp.float32(H * W) * jnp.sum(jnp.log(jnp.abs(s_flat)))
    return x, jac


if __name__ == "__main__":
    key = jax.random.PRNGKey(0)
    kx, ks, kb = jax.random.split(key, 3)

    B, C, H, W = 2, 4, 16, 16
    x = jax.random.normal(kx, (B, C, H, W), dtype=jnp.float32)
    s = 1.0 + 0.1 * jax.random.normal(ks, (1, C, 1, 1), dtype=jnp.float32)
    b = 0.1 * jax.random.normal(kb, (1, C, 1, 1), dtype=jnp.float32)

    # Forward direction of the wrapped flow.
    y, jac_f = actnorm_forward(x, s, b)
    # InverseWrapper.forward == wrapped module's _inverse.
    x_rt, jac_i = actnorm_inverse(y, s, b)

    y = jax.block_until_ready(y)
    x_rt = jax.block_until_ready(x_rt)
    jac_f = jax.block_until_ready(jac_f)
    jac_i = jax.block_until_ready(jac_i)

    # Pure-JAX reference checks.
    y_ref = s * x + b
    jac_ref = H * W * jnp.sum(jnp.log(jnp.abs(s)))

    assert y.shape == (B, C, H, W) and y.dtype == x.dtype
    assert jnp.allclose(y, y_ref, atol=1e-6, rtol=1e-6)
    assert jnp.allclose(jac_f, jac_ref, atol=1e-5, rtol=1e-5)
    assert jnp.allclose(jac_i, -jac_ref, atol=1e-5, rtol=1e-5)
    # Round-trip property of InverseWrapper: inverse(forward(x)) == x.
    assert jnp.allclose(x_rt, x, atol=1e-4, rtol=1e-4)

    print("KERNEL_OK")
</pallas_src>

<mosaic_0001>
module attributes {stable_mosaic.version = 11 : i64} {
  func.func @_affine_rows_kernel(%arg0: i32, %arg1: memref<8x256xf32, #tpu.memory_space<vmem>>, %arg2: memref<8x1xf32, #tpu.memory_space<vmem>>, %arg3: memref<8x1xf32, #tpu.memory_space<vmem>>, %arg4: memref<8x256xf32, #tpu.memory_space<vmem>>) attributes {dimension_semantics = [#tpu.dimension_semantics<parallel>], iteration_bounds = array<i64: 1>, scalar_prefetch = 0 : i64, scratch_operands = 0 : i64, tpu.core_type = #tpu.core_type<tc>, window_params = [{transform_indices = @transform_0, window_bounds = array<i64: 8, 256>}, {transform_indices = @transform_1, window_bounds = array<i64: 8, 1>}, {transform_indices = @transform_2, window_bounds = array<i64: 8, 1>}, {transform_indices = @transform_3, window_bounds = array<i64: 8, 256>}]} {
    %c0 = arith.constant 0 : index
    %c0_0 = arith.constant 0 : index
    %0 = vector.load %arg1[%c0, %c0_0] : memref<8x256xf32, #tpu.memory_space<vmem>>, vector<8x256xf32>
    %c0_1 = arith.constant 0 : index
    %c0_2 = arith.constant 0 : index
    %1 = vector.load %arg2[%c0_1, %c0_2] : memref<8x1xf32, #tpu.memory_space<vmem>>, vector<8x1xf32>
    %2 = vector.broadcast %1 : vector<8x1xf32> to vector<8x256xf32>
    %3 = arith.mulf %0, %2 : vector<8x256xf32>
    %c0_3 = arith.constant 0 : index
    %c0_4 = arith.constant 0 : index
    %4 = vector.load %arg3[%c0_3, %c0_4] : memref<8x1xf32, #tpu.memory_space<vmem>>, vector<8x1xf32>
    %5 = vector.broadcast %4 : vector<8x1xf32> to vector<8x256xf32>
    %6 = arith.addf %3, %5 : vector<8x256xf32>
    %c0_5 = arith.constant 0 : index
    %c0_6 = arith.constant 0 : index
    %7 = vector.load %arg4[%c0_5, %c0_6] : memref<8x256xf32, #tpu.memory_space<vmem>>, vector<8x256xf32>
    tpu.vector_store %arg4[%c0_5, %c0_6], %6 {strides = array<i32>} : memref<8x256xf32, #tpu.memory_space<vmem>>, vector<8x256xf32>,
    return
  }
  func.func @transform_0(%arg0: i32) -> (i32, i32) {
    %c0_i32 = arith.constant 0 : i32
    %c0_i32_0 = arith.constant 0 : i32
    return %arg0, %c0_i32 : i32, i32
  }
  func.func @transform_1(%arg0: i32) -> (i32, i32) {
    %c0_i32 = arith.constant 0 : i32
    %c0_i32_0 = arith.constant 0 : i32
    return %arg0, %c0_i32 : i32, i32
  }
  func.func @transform_2(%arg0: i32) -> (i32, i32) {
    %c0_i32 = arith.constant 0 : i32
    %c0_i32_0 = arith.constant 0 : i32
    return %arg0, %c0_i32 : i32, i32
  }
  func.func @transform_3(%arg0: i32) -> (i32, i32) {
    %c0_i32 = arith.constant 0 : i32
    %c0_i32_0 = arith.constant 0 : i32
    return %arg0, %c0_i32 : i32, i32
  }
}

</mosaic_0001>

<llo_original>
// kernel: tpu_custom_call.1
$region0: #{tpu_custom_call.1}
  #allocation0 [shape = 'u32[]', space=smem, size = 0x4, offset = 0x4, fixed_abs, tag = 'smem constant byte address 0x4 - core index']
  #allocation1 [shape = 'u32[144,128]{1,0:T(1,128)}', space=vmem, size = 0x12000, scoped, tag = 'internal scratch']
  %s0 = inlined_call_operand.vmem [shape: f32[8,256], index: 0, kind: input, shape index: {}]
  %s1 = inlined_call_operand.vmem [shape: f32[8,1], index: 1, kind: input, shape index: {}]
  %s2 = inlined_call_operand.vmem [shape: f32[8,1], index: 2, kind: input, shape index: {}]
  %s3 = inlined_call_operand.hbm [shape: f32[8,256], index: 3, kind: output, shape index: {}]
  %s4 = sld [smem:[#allocation0]]
  $region22: #{tpu_custom_call.1} parent=0
    _
  %s6 = ssub.s32 1, %s4
  %s7 = scalar_select 0, %s6, %s4
  $region1: #{tpu_custom_call.1} parent=0
    #allocation2 [shape = 'u8[8192]{0}', space=vmem, size = 0x2000, scoped, tag = 'output window, operand 0, single buffered']
    #allocation3 [shape = 's32[1]{0}', space=sflag, size = 0x4, scoped, tag = 'scoped memory for tpu_custom_call.1']
    %8 = vsyncpa [#allocation3], 0
    // Predicated region
    $region2: #{tpu_custom_call.1} parent=1 // pred_check
      _
    $region3: #{tpu_custom_call.1} parent=1 // pred_check_branch
      %10 = sbr.rel (0) target = $region5
    $region4: #{tpu_custom_call.1} parent=1 // pred_region
      _
    $region5: #{tpu_custom_call.1} parent=1 // pred_fallthru
      _
    // Predicated region
    $region6: #{tpu_custom_call.1} parent=1 // pred_check
      _
    $region7: #{tpu_custom_call.1} parent=1 // pred_check_branch
      %12 = sbr.rel (0) target = $region9
    $region8: #{tpu_custom_call.1} parent=1 // pred_region
      _
    $region9: #{tpu_custom_call.1} parent=1 // pred_fallthru
      _
    // Predicated region
    $region10: #{tpu_custom_call.1} parent=1 // pred_check
      _
    $region11: #{tpu_custom_call.1} parent=1 // pred_check_branch
      %14 = sbr.rel (0) target = $region13
    $region12: #{tpu_custom_call.1} parent=1 // pred_region
      _
    $region13: #{tpu_custom_call.1} parent=1 // pred_fallthru
      _
    %v15 = vld [vmem:[%s0] sm:$0xff]
    %v16 = vld [vmem:[%s0 + $0x8] sm:$0xff]
    %v17 = vld [vmem:[%s1] sm:$0xff]
    %19 = vset.pattern.permute.xlu0 0
    %20 = vperm.xlu0 %19, %v17
    %v21 = vpop.permute.xlu0 %20
    %v23 = vmul.f32 %v15, %v21
    %v24 = vmul.f32 %v16, %v21
    %v25 = vld [vmem:[%s2] sm:$0xff]
    %27 = vset.pattern.permute.xlu0 0
    %28 = vperm.xlu0 %27, %v25
    %v29 = vpop.permute.xlu0 %28
    %v31 = vadd.f32 %v23, %v29
    %v32 = vadd.f32 %v24, %v29
    %33 = vst [vmem:[#allocation2] sm:$0xff] %v31
    %34 = vst [vmem:[#allocation2 + $0x8] sm:$0xff] %v32
    // Predicated region
    $region14: #{tpu_custom_call.1} parent=1 // pred_check
      _
    $region15: #{tpu_custom_call.1} parent=1 // pred_check_branch
      %36 = sbr.rel (0) target = $region17
    $region16: #{tpu_custom_call.1} parent=1 // pred_region
      %s38 = ssub.s32 256, 256
      %39 = vsyncadd [#allocation3], %s38
      %s41 = sshll.u32 [#allocation2], 4
      %s42 = int_to_ptr.vmem [resolvable:$true] %s41
      %44 = dma.vmem_to_hbm [thread:$0]  %s42, 256, %s3, [#allocation3]
    $region17: #{tpu_custom_call.1} parent=1 // pred_fallthru
      _
    // Predicated region
    $region18: #{tpu_custom_call.1} parent=1 // pred_check
      _
    $region19: #{tpu_custom_call.1} parent=1 // pred_check_branch
      %46 = sbr.rel (0) target = $region21
    $region20: #{tpu_custom_call.1} parent=1 // pred_region
      %47 = dma.done [#allocation3], 256
    $region21: #{tpu_custom_call.1} parent=1 // pred_fallthru
      _
    %48 = vsyncpa [#allocation3], 1

</llo_original>
